<compile_context>
chip_gen: v5e
topology: v5e:2x2
jax: 0.10.0
libtpu: 0.0.40
codegen_flags: <defaults>
</compile_context>

<pallas_src>
import math
import functools

import jax
import jax.numpy as jnp
from jax.experimental import pallas as pl
from jax.experimental.pallas import tpu as pltpu

LN_EPS = 1e-12


# --------------------------------- kernel ---------------------------------
def _attention_kernel(hs_ref, bias_ref, wqkv_ref, wo_ref, consts_ref, out_ref,
                      *, nb, seq, dim, heads, mm_dtype, ln_eps):
    """One grid step handles `nb` batch elements (nb*seq rows).

    hs_ref:     [nb*seq, dim]        hidden states (also the residual input), f32
    bias_ref:   [nb*heads, seq, seq] pre-summed rel_pos + rel_2d_pos + mask(-inf), f32
    wqkv_ref:   [dim, 3*dim]         fused QKV weight; Q columns pre-scaled by 1/sqrt(DH)
    wo_ref:     [dim, dim]           output dense weight
    consts_ref: [5, dim]             packed [q_bias*scale, v_bias, out_bias, ln_gamma, ln_beta]
    out_ref:    [nb*seq, dim]
    """
    dh = dim // heads

    hs = hs_ref[...]                                        # [nb*seq, dim] f32
    consts = consts_ref[...]                                # [5, dim] f32
    q_bias = consts[0:1, :]
    v_bias = consts[1:2, :]
    b_out = consts[2:3, :]
    gamma = consts[3:4, :]
    beta = consts[4:5, :]

    # fast_qkv: one MXU op produces Q, K, V for every row of the block.
    qkv = jnp.dot(hs.astype(mm_dtype), wqkv_ref[...],
                  preferred_element_type=jnp.float32)       # [nb*seq, 3*dim], f32 accumulate
    q = qkv[:, :dim] + q_bias                               # 1/sqrt(dh) already folded in
    k = qkv[:, dim:2 * dim]
    v = qkv[:, 2 * dim:] + v_bias

    # Head-major stacks for ALL (batch, head) pairs at once: [G, seq, dh], G = nb*heads.
    # (static lane/row slices + one stack per tensor; see TODO about reshape-based split)
    def to_heads(x):
        return jnp.stack(
            [x[b * seq:(b + 1) * seq, h * dh:(h + 1) * dh]
             for b in range(nb) for h in range(heads)], axis=0)

    q_h = to_heads(q).astype(mm_dtype)
    k_h = to_heads(k).astype(mm_dtype)
    v_h = to_heads(v).astype(mm_dtype)

    # One batched contraction for every (batch, head) score block, ONE softmax, ONE context.
    scores = jnp.einsum("gqd,gkd->gqk", q_h, k_h,
                        preferred_element_type=jnp.float32)         # [G, seq, seq]
    scores = scores + bias_ref[...]          # rel_pos + rel_2d_pos + mask(-inf), pre-summed

    # softmax over keys in f32 (masked positions -> exp(-inf) == 0, matching masked_fill_)
    m = jnp.max(scores, axis=-1, keepdims=True)
    p = jnp.exp(scores - m)
    p = p * pl.reciprocal(jnp.sum(p, axis=-1, keepdims=True), approx=True)

    ctx = jnp.einsum("gqk,gkd->gqd", p.astype(mm_dtype), v_h,
                     preferred_element_type=jnp.float32)            # [G, seq, dh]

    # Merge heads back along lanes (one concat per batch element), batches along rows.
    rows = [jnp.concatenate([ctx[b * heads + h] for h in range(heads)], axis=-1)
            for b in range(nb)]
    context = rows[0] if nb == 1 else jnp.concatenate(rows, axis=0)  # [nb*seq, dim]

    # LayoutLMv2SelfOutput: dense -> (dropout p=0) -> LayerNorm(x + residual), f32 math.
    x = jnp.dot(context.astype(mm_dtype), wo_ref[...],
                preferred_element_type=jnp.float32) + b_out + hs
    mu = jnp.mean(x, axis=-1, keepdims=True)
    xc = x - mu
    var = jnp.mean(xc * xc, axis=-1, keepdims=True)
    out_ref[...] = xc * jax.lax.rsqrt(var + ln_eps) * gamma + beta


# ---------------------------- one-time preparation ----------------------------
def prepare_params(params, num_heads, *, use_bf16_matmul=False):
    """One-time parameter preparation (NOT per call / per layer):
       - fold 1/sqrt(head_dim) into the Q columns of W_qkv and into q_bias,
       - pack the five per-channel vectors into a single [5, D] block (one DMA descriptor),
       - optionally re-type the two large weights to bf16 for MXU-native matmuls."""
    wqkv, q_bias, v_bias, wo, bo, gamma, beta = params
    d = wqkv.shape[0]
    scale = 1.0 / math.sqrt(d // num_heads)
    wqkv_f = wqkv.at[:, :d].multiply(scale)
    consts = jnp.concatenate([q_bias * scale, v_bias, bo, gamma, beta],
                             axis=0).astype(jnp.float32)            # [5, D]
    mm_dtype = jnp.bfloat16 if use_bf16_matmul else jnp.float32
    return (wqkv_f.astype(mm_dtype), wo.astype(mm_dtype), consts, num_heads, mm_dtype)


def prepare_attention_bias(attention_mask, rel_pos, rel_2d_pos):
    """Pre-sum rel_pos + rel_2d_pos + additive mask into ONE bias tensor [B*H, S, S].
    In the full LayoutLMv2 encoder this sum is identical for every layer: compute it ONCE per
    forward pass and pass the result to each layer's kernel (no per-layer HBM round-trip).
    finite + (-inf) == -inf, so folding the mask additively matches masked_fill_(mask, -inf)."""
    b, h, s, _ = rel_pos.shape
    mask_bias = jnp.where(attention_mask[:, :, None, :] > 0.0, -jnp.inf, 0.0)   # [B,1,1,S]
    bias = (rel_pos + rel_2d_pos + mask_bias).astype(jnp.float32)               # [B,H,S,S]
    return bias.reshape(b * h, s, s)                                            # [B*H,S,S]


def _default_batch_block(batch, seq, dim):
    """Perf-only heuristic: shard the batch across v7x's two TensorCores only when the
    per-core work is non-trivial; otherwise fold the whole batch into one grid step
    (avoids duplicated weight DMAs and a second pipeline prologue at toy sizes)."""
    try:
        kind = jax.devices()[0].device_kind.lower()
    except Exception:
        kind = ""
    two_tc = "v7" in kind
    if two_tc and batch % 2 == 0 and seq * dim >= (128 * 512):
        return batch // 2
    return batch


# --------------------------------- wrapper ---------------------------------
def layoutlmv2_attention(hidden_states, bias_gss, prepared, *, batch_block=None):
    """hidden_states: [B,S,D] f32; bias_gss: [B*H,S,S] f32 (from prepare_attention_bias);
       prepared: output of prepare_params.  Returns [B,S,D] f32."""
    wqkv_f, wo_f, consts, heads, mm_dtype = prepared
    batch, seq, dim = hidden_states.shape
    dh = dim // heads

    nb = batch_block if batch_block is not None else _default_batch_block(batch, seq, dim)
    assert batch % nb == 0
    grid = (batch // nb,)

    hs2 = hidden_states.reshape(batch * seq, dim).astype(jnp.float32)

    flops = (2 * batch * seq * dim * 3 * dim            # QKV projection
             + 2 * 2 * batch * heads * seq * seq * dh   # scores + context
             + 2 * batch * seq * dim * dim)             # output dense
    cost = pl.CostEstimate(
        flops=flops,
        transcendentals=batch * heads * seq * seq,
        bytes_accessed=(2 * hs2.size * 4 + bias_gss.size * 4 + consts.size * 4
                        + wqkv_f.size * wqkv_f.dtype.itemsize
                        + wo_f.size * wo_f.dtype.itemsize),
    )

    grid_spec = pltpu.PrefetchScalarGridSpec(
        num_scalar_prefetch=0,
        grid=grid,
        in_specs=[
            pl.BlockSpec((nb * seq, dim), lambda i: (i, 0)),            # hidden rows/residual
            pl.BlockSpec((nb * heads, seq, seq), lambda i: (i, 0, 0)),  # pre-summed bias
            pl.BlockSpec((dim, 3 * dim), lambda i: (0, 0)),             # W_qkv (constant map)
            pl.BlockSpec((dim, dim), lambda i: (0, 0)),                 # W_out (constant map)
            pl.BlockSpec((5, dim), lambda i: (0, 0)),                   # packed constants
        ],
        out_specs=pl.BlockSpec((nb * seq, dim), lambda i: (i, 0)),
    )
    out2 = pl.pallas_call(
        functools.partial(_attention_kernel, nb=nb, seq=seq, dim=dim, heads=heads,
                          mm_dtype=mm_dtype, ln_eps=LN_EPS),
        out_shape=jax.ShapeDtypeStruct((batch * seq, dim), jnp.float32),
        grid_spec=grid_spec,
        compiler_params=pltpu.CompilerParams(dimension_semantics=("parallel",)),
        cost_estimate=cost,
    )(hs2, bias_gss, wqkv_f, wo_f, consts)
    return out2.reshape(batch, seq, dim)


# ------------------ pure-JAX reference (mirrors the PyTorch forward) ------------------
def reference(hidden_states, attention_mask, rel_pos, rel_2d_pos, params, num_heads):
    wqkv, q_bias, v_bias, wo, bo, gamma, beta = params
    batch, seq, dim = hidden_states.shape
    dh = dim // num_heads
    qkv = hidden_states @ wqkv
    q, k, v = jnp.split(qkv, 3, axis=-1)
    q = q + q_bias[0]
    v = v + v_bias[0]

    def to_heads(x):
        return x.reshape(batch, seq, num_heads, dh).transpose(0, 2, 1, 3)

    ql, kl, vl = to_heads(q), to_heads(k), to_heads(v)
    ql = ql / math.sqrt(dh)
    scores = jnp.einsum("bhqd,bhkd->bhqk", ql, kl)
    scores = scores + rel_pos + rel_2d_pos
    scores = jnp.where((attention_mask > 0)[:, :, None, :], -jnp.inf, scores)
    probs = jax.nn.softmax(scores.astype(jnp.float32), axis=-1)
    ctx = jnp.einsum("bhqk,bhkd->bhqd", probs, vl)
    ctx = ctx.transpose(0, 2, 1, 3).reshape(batch, seq, dim)
    x = ctx @ wo + bo[0] + hidden_states
    mu = jnp.mean(x, axis=-1, keepdims=True)
    var = jnp.mean((x - mu) ** 2, axis=-1, keepdims=True)
    return (x - mu) / jnp.sqrt(var + LN_EPS) * gamma[0] + beta[0]


if __name__ == "__main__":
    B, S, D, H = 2, 8, 32, 4

    key = jax.random.PRNGKey(0)
    k_hs, k_wqkv, k_qb, k_vb, k_wo, k_bo, k_rel, k_rel2d = jax.random.split(key, 8)

    hidden_states = jax.random.normal(k_hs, (B, S, D), dtype=jnp.float32)

    # deterministic synthetic parameters (shapes from the module __init__, fast_qkv=True)
    wqkv = jax.random.normal(k_wqkv, (D, 3 * D), dtype=jnp.float32) * 0.05
    q_bias = jax.random.normal(k_qb, (1, D), dtype=jnp.float32) * 0.02
    v_bias = jax.random.normal(k_vb, (1, D), dtype=jnp.float32) * 0.02
    wo = jax.random.normal(k_wo, (D, D), dtype=jnp.float32) * 0.05
    bo = jax.random.normal(k_bo, (1, D), dtype=jnp.float32) * 0.02
    gamma = jnp.ones((1, D), dtype=jnp.float32)
    beta = jnp.zeros((1, D), dtype=jnp.float32)
    params = (wqkv, q_bias, v_bias, wo, bo, gamma, beta)

    # relative / spatial attention biases; mask: last 2 tokens of batch 1 are padding
    rel_pos = jax.random.normal(k_rel, (B, H, S, S), dtype=jnp.float32) * 0.1
    rel_2d_pos = jax.random.normal(k_rel2d, (B, H, S, S), dtype=jnp.float32) * 0.1
    attention_mask = jnp.zeros((B, 1, S), dtype=jnp.float32)
    attention_mask = attention_mask.at[1, 0, -2:].set(1.0)

    ref = reference(hidden_states, attention_mask, rel_pos, rel_2d_pos, params, H)

    # One-time preparation (amortized across calls / all 12 layers in a real forward pass).
    bias = prepare_attention_bias(attention_mask, rel_pos, rel_2d_pos)    # [B*H, S, S]
    prepared_f32 = prepare_params(params, H, use_bf16_matmul=False)

    # f32 MXU path, default (single-step) grid.
    out = layoutlmv2_attention(hidden_states, bias, prepared_f32)
    out = jax.block_until_ready(out)
    assert out.shape == (B, S, D)
    assert jnp.allclose(out, ref, atol=5e-3, rtol=5e-3), "mismatch (f32 path)"

    # Multi-step grid (one batch element per step — the v7x megacore layout) must also match.
    out_split = layoutlmv2_attention(hidden_states, bias, prepared_f32, batch_block=1)
    out_split = jax.block_until_ready(out_split)
    assert jnp.allclose(out_split, ref, atol=5e-3, rtol=5e-3), "mismatch (split grid)"

    # bf16 MXU-operand path (f32 accumulation, f32 softmax/LayerNorm) — looser tolerance.
    prepared_bf16 = prepare_params(params, H, use_bf16_matmul=True)
    out_bf16 = layoutlmv2_attention(hidden_states, bias, prepared_bf16)
    out_bf16 = jax.block_until_ready(out_bf16)
    assert jnp.allclose(out_bf16, ref, atol=5e-2, rtol=5e-2), "mismatch (bf16 MXU path)"

    print("KERNEL_OK")
</pallas_src>

<mosaic_0001>
module attributes {stable_mosaic.version = 11 : i64} {
  func.func @_attention_kernel(%arg0: i32, %arg1: memref<16x32xf32, #tpu.memory_space<vmem>>, %arg2: memref<8x8x8xf32, #tpu.memory_space<vmem>>, %arg3: memref<32x96xf32, #tpu.memory_space<vmem>>, %arg4: memref<32x32xf32, #tpu.memory_space<vmem>>, %arg5: memref<5x32xf32, #tpu.memory_space<vmem>>, %arg6: memref<16x32xf32, #tpu.memory_space<vmem>>) attributes {dimension_semantics = [#tpu.dimension_semantics<parallel>], iteration_bounds = array<i64: 1>, scalar_prefetch = 0 : i64, scratch_operands = 0 : i64, tpu.core_type = #tpu.core_type<tc>, window_params = [{transform_indices = @transform_0, window_bounds = array<i64: 16, 32>}, {transform_indices = @transform_1, window_bounds = array<i64: 8, 8, 8>}, {pipeline_mode = #tpu.pipeline_mode<synchronous>, transform_indices = @transform_2, window_bounds = array<i64: 32, 96>}, {pipeline_mode = #tpu.pipeline_mode<synchronous>, transform_indices = @transform_3, window_bounds = array<i64: 32, 32>}, {pipeline_mode = #tpu.pipeline_mode<synchronous>, transform_indices = @transform_4, window_bounds = array<i64: 5, 32>}, {transform_indices = @transform_5, window_bounds = array<i64: 16, 32>}]} {
    %c0 = arith.constant 0 : index
    %c0_0 = arith.constant 0 : index
    %0 = vector.load %arg1[%c0, %c0_0] : memref<16x32xf32, #tpu.memory_space<vmem>>, vector<16x32xf32>
    %c0_1 = arith.constant 0 : index
    %c0_2 = arith.constant 0 : index
    %1 = vector.load %arg5[%c0_1, %c0_2] : memref<5x32xf32, #tpu.memory_space<vmem>>, vector<5x32xf32>
    %2 = vector.extract_strided_slice %1 {offsets = [0, 0], sizes = [1, 32], strides = [1, 1]} : vector<5x32xf32> to vector<1x32xf32>
    %3 = vector.extract_strided_slice %1 {offsets = [1, 0], sizes = [1, 32], strides = [1, 1]} : vector<5x32xf32> to vector<1x32xf32>
    %4 = vector.extract_strided_slice %1 {offsets = [2, 0], sizes = [1, 32], strides = [1, 1]} : vector<5x32xf32> to vector<1x32xf32>
    %5 = vector.extract_strided_slice %1 {offsets = [3, 0], sizes = [1, 32], strides = [1, 1]} : vector<5x32xf32> to vector<1x32xf32>
    %6 = vector.extract_strided_slice %1 {offsets = [4, 0], sizes = [1, 32], strides = [1, 1]} : vector<5x32xf32> to vector<1x32xf32>
    %c0_3 = arith.constant 0 : index
    %c0_4 = arith.constant 0 : index
    %7 = vector.load %arg3[%c0_3, %c0_4] : memref<32x96xf32, #tpu.memory_space<vmem>>, vector<32x96xf32>
    %cst = arith.constant dense<0.000000e+00> : vector<16x96xf32>
    %8 = tpu.matmul %0, %7, %cst {dimension_numbers = #tpu.dot_dimension_numbers<[1], [0], [0], [1], [0, 0, 1, 1], [], []>} : vector<16x32xf32>, vector<32x96xf32>, vector<16x96xf32> -> vector<16x96xf32>
    %9 = vector.extract_strided_slice %8 {offsets = [0, 0], sizes = [16, 32], strides = [1, 1]} : vector<16x96xf32> to vector<16x32xf32>
    %10 = vector.broadcast %2 : vector<1x32xf32> to vector<16x32xf32>
    %11 = arith.addf %9, %10 : vector<16x32xf32>
    %12 = vector.extract_strided_slice %8 {offsets = [0, 32], sizes = [16, 32], strides = [1, 1]} : vector<16x96xf32> to vector<16x32xf32>
    %13 = vector.extract_strided_slice %8 {offsets = [0, 64], sizes = [16, 32], strides = [1, 1]} : vector<16x96xf32> to vector<16x32xf32>
    %14 = vector.broadcast %3 : vector<1x32xf32> to vector<16x32xf32>
    %15 = arith.addf %13, %14 : vector<16x32xf32>
    %16 = vector.extract_strided_slice %11 {offsets = [0, 0], sizes = [8, 8], strides = [1, 1]} : vector<16x32xf32> to vector<8x8xf32>
    %17 = vector.extract_strided_slice %11 {offsets = [0, 8], sizes = [8, 8], strides = [1, 1]} : vector<16x32xf32> to vector<8x8xf32>
    %18 = vector.extract_strided_slice %11 {offsets = [0, 16], sizes = [8, 8], strides = [1, 1]} : vector<16x32xf32> to vector<8x8xf32>
    %19 = vector.extract_strided_slice %11 {offsets = [0, 24], sizes = [8, 8], strides = [1, 1]} : vector<16x32xf32> to vector<8x8xf32>
    %20 = vector.extract_strided_slice %11 {offsets = [8, 0], sizes = [8, 8], strides = [1, 1]} : vector<16x32xf32> to vector<8x8xf32>
    %21 = vector.extract_strided_slice %11 {offsets = [8, 8], sizes = [8, 8], strides = [1, 1]} : vector<16x32xf32> to vector<8x8xf32>
    %22 = vector.extract_strided_slice %11 {offsets = [8, 16], sizes = [8, 8], strides = [1, 1]} : vector<16x32xf32> to vector<8x8xf32>
    %23 = vector.extract_strided_slice %11 {offsets = [8, 24], sizes = [8, 8], strides = [1, 1]} : vector<16x32xf32> to vector<8x8xf32>
    %24 = vector.shape_cast %16 : vector<8x8xf32> to vector<1x8x8xf32>
    %25 = vector.shape_cast %17 : vector<8x8xf32> to vector<1x8x8xf32>
    %26 = vector.shape_cast %18 : vector<8x8xf32> to vector<1x8x8xf32>
    %27 = vector.shape_cast %19 : vector<8x8xf32> to vector<1x8x8xf32>
    %28 = vector.shape_cast %20 : vector<8x8xf32> to vector<1x8x8xf32>
    %29 = vector.shape_cast %21 : vector<8x8xf32> to vector<1x8x8xf32>
    %30 = vector.shape_cast %22 : vector<8x8xf32> to vector<1x8x8xf32>
    %31 = vector.shape_cast %23 : vector<8x8xf32> to vector<1x8x8xf32>
    %32 = tpu.concatenate %24, %25, %26, %27, %28, %29, %30, %31 in 0 : vector<1x8x8xf32>, vector<1x8x8xf32>, vector<1x8x8xf32>, vector<1x8x8xf32>, vector<1x8x8xf32>, vector<1x8x8xf32>, vector<1x8x8xf32>, vector<1x8x8xf32> -> vector<8x8x8xf32>
    %33 = vector.extract_strided_slice %12 {offsets = [0, 0], sizes = [8, 8], strides = [1, 1]} : vector<16x32xf32> to vector<8x8xf32>
    %34 = vector.extract_strided_slice %12 {offsets = [0, 8], sizes = [8, 8], strides = [1, 1]} : vector<16x32xf32> to vector<8x8xf32>
    %35 = vector.extract_strided_slice %12 {offsets = [0, 16], sizes = [8, 8], strides = [1, 1]} : vector<16x32xf32> to vector<8x8xf32>
    %36 = vector.extract_strided_slice %12 {offsets = [0, 24], sizes = [8, 8], strides = [1, 1]} : vector<16x32xf32> to vector<8x8xf32>
    %37 = vector.extract_strided_slice %12 {offsets = [8, 0], sizes = [8, 8], strides = [1, 1]} : vector<16x32xf32> to vector<8x8xf32>
    %38 = vector.extract_strided_slice %12 {offsets = [8, 8], sizes = [8, 8], strides = [1, 1]} : vector<16x32xf32> to vector<8x8xf32>
    %39 = vector.extract_strided_slice %12 {offsets = [8, 16], sizes = [8, 8], strides = [1, 1]} : vector<16x32xf32> to vector<8x8xf32>
    %40 = vector.extract_strided_slice %12 {offsets = [8, 24], sizes = [8, 8], strides = [1, 1]} : vector<16x32xf32> to vector<8x8xf32>
    %41 = vector.shape_cast %33 : vector<8x8xf32> to vector<1x8x8xf32>
    %42 = vector.shape_cast %34 : vector<8x8xf32> to vector<1x8x8xf32>
    %43 = vector.shape_cast %35 : vector<8x8xf32> to vector<1x8x8xf32>
    %44 = vector.shape_cast %36 : vector<8x8xf32> to vector<1x8x8xf32>
    %45 = vector.shape_cast %37 : vector<8x8xf32> to vector<1x8x8xf32>
    %46 = vector.shape_cast %38 : vector<8x8xf32> to vector<1x8x8xf32>
    %47 = vector.shape_cast %39 : vector<8x8xf32> to vector<1x8x8xf32>
    %48 = vector.shape_cast %40 : vector<8x8xf32> to vector<1x8x8xf32>
    %49 = tpu.concatenate %41, %42, %43, %44, %45, %46, %47, %48 in 0 : vector<1x8x8xf32>, vector<1x8x8xf32>, vector<1x8x8xf32>, vector<1x8x8xf32>, vector<1x8x8xf32>, vector<1x8x8xf32>, vector<1x8x8xf32>, vector<1x8x8xf32> -> vector<8x8x8xf32>
    %50 = vector.extract_strided_slice %15 {offsets = [0, 0], sizes = [8, 8], strides = [1, 1]} : vector<16x32xf32> to vector<8x8xf32>
    %51 = vector.extract_strided_slice %15 {offsets = [0, 8], sizes = [8, 8], strides = [1, 1]} : vector<16x32xf32> to vector<8x8xf32>
    %52 = vector.extract_strided_slice %15 {offsets = [0, 16], sizes = [8, 8], strides = [1, 1]} : vector<16x32xf32> to vector<8x8xf32>
    %53 = vector.extract_strided_slice %15 {offsets = [0, 24], sizes = [8, 8], strides = [1, 1]} : vector<16x32xf32> to vector<8x8xf32>
    %54 = vector.extract_strided_slice %15 {offsets = [8, 0], sizes = [8, 8], strides = [1, 1]} : vector<16x32xf32> to vector<8x8xf32>
    %55 = vector.extract_strided_slice %15 {offsets = [8, 8], sizes = [8, 8], strides = [1, 1]} : vector<16x32xf32> to vector<8x8xf32>
    %56 = vector.extract_strided_slice %15 {offsets = [8, 16], sizes = [8, 8], strides = [1, 1]} : vector<16x32xf32> to vector<8x8xf32>
    %57 = vector.extract_strided_slice %15 {offsets = [8, 24], sizes = [8, 8], strides = [1, 1]} : vector<16x32xf32> to vector<8x8xf32>
    %58 = vector.shape_cast %50 : vector<8x8xf32> to vector<1x8x8xf32>
    %59 = vector.shape_cast %51 : vector<8x8xf32> to vector<1x8x8xf32>
    %60 = vector.shape_cast %52 : vector<8x8xf32> to vector<1x8x8xf32>
    %61 = vector.shape_cast %53 : vector<8x8xf32> to vector<1x8x8xf32>
    %62 = vector.shape_cast %54 : vector<8x8xf32> to vector<1x8x8xf32>
    %63 = vector.shape_cast %55 : vector<8x8xf32> to vector<1x8x8xf32>
    %64 = vector.shape_cast %56 : vector<8x8xf32> to vector<1x8x8xf32>
    %65 = vector.shape_cast %57 : vector<8x8xf32> to vector<1x8x8xf32>
    %66 = tpu.concatenate %58, %59, %60, %61, %62, %63, %64, %65 in 0 : vector<1x8x8xf32>, vector<1x8x8xf32>, vector<1x8x8xf32>, vector<1x8x8xf32>, vector<1x8x8xf32>, vector<1x8x8xf32>, vector<1x8x8xf32>, vector<1x8x8xf32> -> vector<8x8x8xf32>
    "tpu.trace_start"() <{level = 10 : i32, message = "gqd,gkd->gqk"}> : () -> ()
    %cst_5 = arith.constant dense<0.000000e+00> : vector<8x8x8xf32>
    %67 = tpu.matmul %32, %49, %cst_5 {dimension_numbers = #tpu.dot_dimension_numbers<[2], [2], [1], [1], [0, 0, 0, 1, 1, 1], [0], [0]>} : vector<8x8x8xf32>, vector<8x8x8xf32>, vector<8x8x8xf32> -> vector<8x8x8xf32>
    "tpu.trace_stop"() : () -> ()
    %c0_6 = arith.constant 0 : index
    %c0_7 = arith.constant 0 : index
    %c0_8 = arith.constant 0 : index
    %68 = vector.load %arg2[%c0_6, %c0_7, %c0_8] : memref<8x8x8xf32, #tpu.memory_space<vmem>>, vector<8x8x8xf32>
    %69 = arith.addf %67, %68 : vector<8x8x8xf32>
    %cst_9 = arith.constant dense<0xFF800000> : vector<8x8xf32>
    %70 = vector.multi_reduction <maximumf>, %69, %cst_9 [2] : vector<8x8x8xf32> to vector<8x8xf32>
    %71 = vector.shape_cast %70 : vector<8x8xf32> to vector<8x8x1xf32>
    %72 = vector.broadcast %71 : vector<8x8x1xf32> to vector<8x8x8xf32>
    %73 = arith.subf %69, %72 : vector<8x8x8xf32>
    %74 = math.exp %73 : vector<8x8x8xf32>
    %cst_10 = arith.constant dense<0.000000e+00> : vector<8x8xf32>
    %75 = vector.multi_reduction <add>, %74, %cst_10 [2] : vector<8x8x8xf32> to vector<8x8xf32>
    %76 = vector.shape_cast %75 : vector<8x8xf32> to vector<8x8x1xf32>
    %77 = tpu.reciprocal %76 {approx = true} : vector<8x8x1xf32> -> vector<8x8x1xf32>
    %78 = vector.broadcast %77 : vector<8x8x1xf32> to vector<8x8x8xf32>
    %79 = arith.mulf %74, %78 : vector<8x8x8xf32>
    "tpu.trace_start"() <{level = 10 : i32, message = "gqk,gkd->gqd"}> : () -> ()
    %cst_11 = arith.constant dense<0.000000e+00> : vector<8x8x8xf32>
    %80 = tpu.matmul %79, %66, %cst_11 {dimension_numbers = #tpu.dot_dimension_numbers<[2], [1], [1], [2], [0, 0, 0, 1, 1, 2], [0], [0]>} : vector<8x8x8xf32>, vector<8x8x8xf32>, vector<8x8x8xf32> -> vector<8x8x8xf32>
    "tpu.trace_stop"() : () -> ()
    %81 = vector.extract_strided_slice %80 {offsets = [0, 0, 0], sizes = [1, 8, 8], strides = [1, 1, 1]} : vector<8x8x8xf32> to vector<1x8x8xf32>
    %82 = vector.shape_cast %81 : vector<1x8x8xf32> to vector<8x8xf32>
    %83 = vector.extract_strided_slice %80 {offsets = [1, 0, 0], sizes = [1, 8, 8], strides = [1, 1, 1]} : vector<8x8x8xf32> to vector<1x8x8xf32>
    %84 = vector.shape_cast %83 : vector<1x8x8xf32> to vector<8x8xf32>
    %85 = vector.extract_strided_slice %80 {offsets = [2, 0, 0], sizes = [1, 8, 8], strides = [1, 1, 1]} : vector<8x8x8xf32> to vector<1x8x8xf32>
    %86 = vector.shape_cast %85 : vector<1x8x8xf32> to vector<8x8xf32>
    %87 = vector.extract_strided_slice %80 {offsets = [3, 0, 0], sizes = [1, 8, 8], strides = [1, 1, 1]} : vector<8x8x8xf32> to vector<1x8x8xf32>
    %88 = vector.shape_cast %87 : vector<1x8x8xf32> to vector<8x8xf32>
    %89 = tpu.concatenate %82, %84, %86, %88 in 1 : vector<8x8xf32>, vector<8x8xf32>, vector<8x8xf32>, vector<8x8xf32> -> vector<8x32xf32>
    %90 = vector.extract_strided_slice %80 {offsets = [4, 0, 0], sizes = [1, 8, 8], strides = [1, 1, 1]} : vector<8x8x8xf32> to vector<1x8x8xf32>
    %91 = vector.shape_cast %90 : vector<1x8x8xf32> to vector<8x8xf32>
    %92 = vector.extract_strided_slice %80 {offsets = [5, 0, 0], sizes = [1, 8, 8], strides = [1, 1, 1]} : vector<8x8x8xf32> to vector<1x8x8xf32>
    %93 = vector.shape_cast %92 : vector<1x8x8xf32> to vector<8x8xf32>
    %94 = vector.extract_strided_slice %80 {offsets = [6, 0, 0], sizes = [1, 8, 8], strides = [1, 1, 1]} : vector<8x8x8xf32> to vector<1x8x8xf32>
    %95 = vector.shape_cast %94 : vector<1x8x8xf32> to vector<8x8xf32>
    %96 = vector.extract_strided_slice %80 {offsets = [7, 0, 0], sizes = [1, 8, 8], strides = [1, 1, 1]} : vector<8x8x8xf32> to vector<1x8x8xf32>
    %97 = vector.shape_cast %96 : vector<1x8x8xf32> to vector<8x8xf32>
    %98 = tpu.concatenate %91, %93, %95, %97 in 1 : vector<8x8xf32>, vector<8x8xf32>, vector<8x8xf32>, vector<8x8xf32> -> vector<8x32xf32>
    %99 = tpu.concatenate %89, %98 in 0 : vector<8x32xf32>, vector<8x32xf32> -> vector<16x32xf32>
    %c0_12 = arith.constant 0 : index
    %c0_13 = arith.constant 0 : index
    %100 = vector.load %arg4[%c0_12, %c0_13] : memref<32x32xf32, #tpu.memory_space<vmem>>, vector<32x32xf32>
    %cst_14 = arith.constant dense<0.000000e+00> : vector<16x32xf32>
    %101 = tpu.matmul %99, %100, %cst_14 {dimension_numbers = #tpu.dot_dimension_numbers<[1], [0], [0], [1], [0, 0, 1, 1], [], []>} : vector<16x32xf32>, vector<32x32xf32>, vector<16x32xf32> -> vector<16x32xf32>
    %102 = vector.broadcast %4 : vector<1x32xf32> to vector<16x32xf32>
    %103 = arith.addf %101, %102 : vector<16x32xf32>
    %104 = arith.addf %103, %0 : vector<16x32xf32>
    %cst_15 = arith.constant dense<0.000000e+00> : vector<16xf32>
    %105 = vector.multi_reduction <add>, %104, %cst_15 [1] : vector<16x32xf32> to vector<16xf32>
    %106 = vector.shape_cast %105 : vector<16xf32> to vector<16x1xf32>
    %cst_16 = arith.constant 3.200000e+01 : f32
    %107 = vector.broadcast %cst_16 : f32 to vector<16x1xf32>
    %108 = arith.divf %106, %107 : vector<16x1xf32>
    %109 = vector.broadcast %108 : vector<16x1xf32> to vector<16x32xf32>
    %110 = arith.subf %104, %109 : vector<16x32xf32>
    %111 = arith.mulf %110, %110 : vector<16x32xf32>
    %cst_17 = arith.constant dense<0.000000e+00> : vector<16xf32>
    %112 = vector.multi_reduction <add>, %111, %cst_17 [1] : vector<16x32xf32> to vector<16xf32>
    %113 = vector.shape_cast %112 : vector<16xf32> to vector<16x1xf32>
    %cst_18 = arith.constant 3.200000e+01 : f32
    %114 = vector.broadcast %cst_18 : f32 to vector<16x1xf32>
    %115 = arith.divf %113, %114 : vector<16x1xf32>
    %cst_19 = arith.constant 9.99999996E-13 : f32
    %116 = vector.broadcast %cst_19 : f32 to vector<16x1xf32>
    %117 = arith.addf %115, %116 : vector<16x1xf32>
    %118 = math.rsqrt %117 : vector<16x1xf32>
    %119 = vector.broadcast %118 : vector<16x1xf32> to vector<16x32xf32>
    %120 = arith.mulf %110, %119 : vector<16x32xf32>
    %121 = vector.broadcast %5 : vector<1x32xf32> to vector<16x32xf32>
    %122 = arith.mulf %120, %121 : vector<16x32xf32>
    %123 = vector.broadcast %6 : vector<1x32xf32> to vector<16x32xf32>
    %124 = arith.addf %122, %123 : vector<16x32xf32>
    %c0_20 = arith.constant 0 : index
    %c0_21 = arith.constant 0 : index
    %125 = vector.load %arg6[%c0_20, %c0_21] : memref<16x32xf32, #tpu.memory_space<vmem>>, vector<16x32xf32>
    tpu.vector_store %arg6[%c0_20, %c0_21], %124 {strides = array<i32>} : memref<16x32xf32, #tpu.memory_space<vmem>>, vector<16x32xf32>,
    return
  }
  func.func @transform_0(%arg0: i32) -> (i32, i32) {
    %c0_i32 = arith.constant 0 : i32
    %c0_i32_0 = arith.constant 0 : i32
    return %arg0, %c0_i32 : i32, i32
  }
  func.func @transform_1(%arg0: i32) -> (i32, i32, i32) {
    %c0_i32 = arith.constant 0 : i32
    %c0_i32_0 = arith.constant 0 : i32
    %c0_i32_1 = arith.constant 0 : i32
    return %arg0, %c0_i32, %c0_i32_0 : i32, i32, i32
  }
  func.func @transform_2(%arg0: i32) -> (i32, i32) {
    %c0_i32 = arith.constant 0 : i32
    %c0_i32_0 = arith.constant 0 : i32
    %c0_i32_1 = arith.constant 0 : i32
    return %c0_i32, %c0_i32_0 : i32, i32
  }
  func.func @transform_3(%arg0: i32) -> (i32, i32) {
    %c0_i32 = arith.constant 0 : i32
    %c0_i32_0 = arith.constant 0 : i32
    %c0_i32_1 = arith.constant 0 : i32
    return %c0_i32, %c0_i32_0 : i32, i32
  }
  func.func @transform_4(%arg0: i32) -> (i32, i32) {
    %c0_i32 = arith.constant 0 : i32
    %c0_i32_0 = arith.constant 0 : i32
    %c0_i32_1 = arith.constant 0 : i32
    return %c0_i32, %c0_i32_0 : i32, i32
  }
  func.func @transform_5(%arg0: i32) -> (i32, i32) {
    %c0_i32 = arith.constant 0 : i32
    %c0_i32_0 = arith.constant 0 : i32
    return %arg0, %c0_i32 : i32, i32
  }
}

</mosaic_0001>

<llo_original>
// kernel: tpu_custom_call.1
$region0: #{tpu_custom_call.1}
  #allocation0 [shape = 'u32[]', space=smem, size = 0x4, offset = 0x4, fixed_abs, tag = 'smem constant byte address 0x4 - core index']
  #allocation1 [shape = 'u32[72,128]{1,0:T(1,128)}', space=vmem, size = 0x9000, scoped, tag = 'internal scratch']
  %s0 = inlined_call_operand.hbm [shape: f32[16,32], index: 0, kind: input, shape index: {}]
  %s1 = inlined_call_operand.hbm [shape: f32[8,8,8], index: 1, kind: input, shape index: {}]
  %s2 = inlined_call_operand.hbm [shape: f32[32,96], index: 2, kind: input, shape index: {}]
  %s3 = inlined_call_operand.hbm [shape: f32[32,32], index: 3, kind: input, shape index: {}]
  %s4 = inlined_call_operand.hbm [shape: f32[5,32], index: 4, kind: input, shape index: {}]
  %s5 = inlined_call_operand.hbm [shape: f32[16,32], index: 5, kind: output, shape index: {}]
  %s6 = sld [smem:[#allocation0]]
  $region50: #{tpu_custom_call.1} parent=0
    _
  %s8 = ssub.s32 1, %s6
  %s9 = scalar_select 0, %s8, %s6
  $region1: #{tpu_custom_call.1} parent=0
    #allocation2 [shape = 'u8[8192]{0}', space=vmem, size = 0x2000, scoped, tag = 'input window, operand 0, single buffered']
    #allocation3 [shape = 's32[1]{0}', space=sflag, size = 0x4, scoped, tag = 'scoped memory for tpu_custom_call.1']
    #allocation4 [shape = 's32[1]{0}', space=sflag, size = 0x4, scoped, tag = 'scoped memory for tpu_custom_call.1']
    #allocation5 [shape = 'u8[32768]{0}', space=vmem, size = 0x8000, scoped, tag = 'input window, operand 1, single buffered']
    #allocation6 [shape = 's32[1]{0}', space=sflag, size = 0x4, scoped, tag = 'scoped memory for tpu_custom_call.1']
    #allocation7 [shape = 'u8[16384]{0}', space=vmem, size = 0x4000, scoped, tag = 'input window, operand 2, single buffered']
    #allocation8 [shape = 'u8[16384]{0}', space=vmem, size = 0x4000, scoped, tag = 'input window, operand 3, single buffered']
    #allocation9 [shape = 's32[1]{0}', space=sflag, size = 0x4, scoped, tag = 'scoped memory for tpu_custom_call.1']
    #allocation10 [shape = 'u8[4096]{0}', space=vmem, size = 0x1000, scoped, tag = 'input window, operand 4, single buffered']
    #allocation11 [shape = 'u8[8192]{0}', space=vmem, size = 0x2000, scoped, tag = 'output window, operand 0, single buffered']
    %10 = vsyncpa [#allocation3], 0
    %11 = vsyncpa [#allocation6], 0
    %12 = vsyncpa [#allocation9], 0
    %13 = vsyncpa [#allocation4], 0
    // Predicated region
    $region2: #{tpu_custom_call.1} parent=1 // pred_check
      _
    $region3: #{tpu_custom_call.1} parent=1 // pred_check_branch
      %15 = sbr.rel (0) target = $region5
    $region4: #{tpu_custom_call.1} parent=1 // pred_region
      %17 = vsyncadd [#allocation3], 0
      %s18 = sshll.u32 %s0, 4
      %s19 = int_to_ptr.hbm [resolvable:$true] %s18
      %s20 = sshll.u32 [#allocation2], 4
      %s21 = int_to_ptr.vmem [resolvable:$true] %s20
      %26 = dma.hbm_to_vmem [thread:$0]  %s19, 256, %s21, [#allocation3], 128, 128, 8
    $region5: #{tpu_custom_call.1} parent=1 // pred_fallthru
      _
    // Predicated region
    $region6: #{tpu_custom_call.1} parent=1 // pred_check
      _
    $region7: #{tpu_custom_call.1} parent=1 // pred_check_branch
      %28 = sbr.rel (0) target = $region9
    $region8: #{tpu_custom_call.1} parent=1 // pred_region
      %30 = vsyncadd [#allocation6], 0
      %s31 = sshll.u32 %s1, 4
      %s32 = int_to_ptr.hbm [resolvable:$true] %s31
      %s33 = sshll.u32 [#allocation5], 4
      %s34 = int_to_ptr.vmem [resolvable:$true] %s33
      %39 = dma.hbm_to_vmem [thread:$0]  %s32, 1024, %s34, [#allocation6], 128, 128, 8
    $region9: #{tpu_custom_call.1} parent=1 // pred_fallthru
      _
    // Predicated region
    $region10: #{tpu_custom_call.1} parent=1 // pred_check
      _
    $region11: #{tpu_custom_call.1} parent=1 // pred_check_branch
      %41 = sbr.rel (0) target = $region13
    $region12: #{tpu_custom_call.1} parent=1 // pred_region
      %43 = vsyncadd [#allocation6], 0
      %s44 = sshll.u32 %s2, 4
      %s45 = int_to_ptr.hbm [resolvable:$true] %s44
      %s46 = sshll.u32 [#allocation7], 4
      %s47 = int_to_ptr.vmem [resolvable:$true] %s46
      %52 = dma.hbm_to_vmem [thread:$0]  %s45, 512, %s47, [#allocation6], 128, 128, 8
    $region13: #{tpu_custom_call.1} parent=1 // pred_fallthru
      _
    // Predicated region
    $region14: #{tpu_custom_call.1} parent=1 // pred_check
      _
    $region15: #{tpu_custom_call.1} parent=1 // pred_check_branch
      %54 = sbr.rel (0) target = $region17
    $region16: #{tpu_custom_call.1} parent=1 // pred_region
      %56 = vsyncadd [#allocation9], 0
      %s57 = sshll.u32 %s3, 4
      %s58 = int_to_ptr.hbm [resolvable:$true] %s57
      %s59 = sshll.u32 [#allocation8], 4
      %s60 = int_to_ptr.vmem [resolvable:$true] %s59
      %65 = dma.hbm_to_vmem [thread:$0]  %s58, 512, %s60, [#allocation9], 128, 128, 8
    $region17: #{tpu_custom_call.1} parent=1 // pred_fallthru
      _
    // Predicated region
    $region18: #{tpu_custom_call.1} parent=1 // pred_check
      _
    $region19: #{tpu_custom_call.1} parent=1 // pred_check_branch
      %67 = sbr.rel (0) target = $region21
    $region20: #{tpu_custom_call.1} parent=1 // pred_region
      %69 = vsyncadd [#allocation9], 0
      %s71 = sshll.u32 %s4, 4
      %s72 = int_to_ptr.hbm [resolvable:$true] %s71
      %s73 = sshll.u32 [#allocation10], 4
      %s74 = int_to_ptr.vmem [resolvable:$true] %s73
      %76 = dma.hbm_to_vmem [thread:$0]  %s72, 128, %s74, [#allocation9]
    $region21: #{tpu_custom_call.1} parent=1 // pred_fallthru
      _
    // Predicated region
    $region22: #{tpu_custom_call.1} parent=1 // pred_check
      _
    $region23: #{tpu_custom_call.1} parent=1 // pred_check_branch
      %78 = sbr.rel (0) target = $region25
    $region24: #{tpu_custom_call.1} parent=1 // pred_region
      %80 = dma.done [#allocation3], 256
    $region25: #{tpu_custom_call.1} parent=1 // pred_fallthru
      _
    // Predicated region
    $region26: #{tpu_custom_call.1} parent=1 // pred_check
      _
    $region27: #{tpu_custom_call.1} parent=1 // pred_check_branch
      %82 = sbr.rel (0) target = $region29
    $region28: #{tpu_custom_call.1} parent=1 // pred_region
      %84 = dma.done [#allocation6], 1024
    $region29: #{tpu_custom_call.1} parent=1 // pred_fallthru
      _
    // Predicated region
    $region30: #{tpu_custom_call.1} parent=1 // pred_check
      _
    $region31: #{tpu_custom_call.1} parent=1 // pred_check_branch
      %86 = sbr.rel (0) target = $region33
    $region32: #{tpu_custom_call.1} parent=1 // pred_region
      %88 = dma.done [#allocation6], 512
    $region33: #{tpu_custom_call.1} parent=1 // pred_fallthru
      _
    // Predicated region
    $region34: #{tpu_custom_call.1} parent=1 // pred_check
      _
    $region35: #{tpu_custom_call.1} parent=1 // pred_check_branch
      %90 = sbr.rel (0) target = $region37
    $region36: #{tpu_custom_call.1} parent=1 // pred_region
      %92 = dma.done [#allocation9], 512
    $region37: #{tpu_custom_call.1} parent=1 // pred_fallthru
      _
    // Predicated region
    $region38: #{tpu_custom_call.1} parent=1 // pred_check
      _
    $region39: #{tpu_custom_call.1} parent=1 // pred_check_branch
      %94 = sbr.rel (0) target = $region41
    $region40: #{tpu_custom_call.1} parent=1 // pred_region
      %96 = dma.done [#allocation9], 128
    $region41: #{tpu_custom_call.1} parent=1 // pred_fallthru
      _
    %v97 = vld [vmem:[#allocation2] sm:$0xff]
    %v98 = vld [vmem:[#allocation2 + $0x8] sm:$0xff]
    %v99 = vld [vmem:[#allocation10] sm:$0x1f]
    %v100 = vld [vmem:[#allocation7] sm:$0xff]
    %v101 = vld [vmem:[#allocation7 + $0x8] sm:$0xff]
    %v102 = vld [vmem:[#allocation7 + $0x10] sm:$0xff]
    %v103 = vld [vmem:[#allocation7 + $0x18] sm:$0xff]
    %vm104 = vcmask 261120
    %v106 = vsel %vm104, %v97, 0
    %v109 = vsel %vm104, %v98, 0
    %111 = vmatpush.msra.mxu0 0.0
    %112 = vmatpush.msra.mxu0 0.0
    %113 = vmatpush.msra.mxu0 0.0
    %114 = vmatpush.msra.mxu0 0.0
    %115 = vmatpush.msra.mxu0 0.0
    %116 = vmatpush.msra.mxu0 0.0
    %117 = vmatpush.msra.mxu0 0.0
    %118 = vmatpush.msra.mxu0 0.0
    %119 = vmatpush.msra.mxu0 0.0
    %120 = vmatpush.msra.mxu0 0.0
    %121 = vmatpush.msra.mxu0 0.0
    %122 = vmatpush.msra.mxu0 0.0
    %123 = vmatpush.msra.mxu0 %v103
    %124 = vmatpush.msra.mxu0 %v102
    %125 = vmatpush.msra.mxu0 %v101
    %126 = vmatpush.msra.mxu0 %v100
    %127 = vmatmul.f32.gmra.mxu0 %v106
    %v128 = vpop.f32.mrf.mxu0
    %v129 = vadd.f32 0.0, %v128
    %130 = vmatmul.f32.gmra.mxu0 %v109
    %v131 = vpop.f32.mrf.mxu0
    %v132 = vadd.f32 0.0, %v131
    %133 = vdwg.mxu0
    %v134 = vperm.slane %v99, 0
    %v135 = vadd.f32 %v129, %v134
    %v136 = vadd.f32 %v132, %v134
    %v137 = vperm.slane %v99, 1
    %139 = vrot.lane.b32.xlu0 %v137, 64
    %v140 = vpop.permute.xlu0 %139
    %v142 = vadd.f32 %v129, %v140
    %v143 = vadd.f32 %v132, %v140
    %145 = vrot.lane.b32.xlu0 %v135, 120
    %v146 = vpop.permute.xlu0 %145
    %147 = vrot.lane.b32.xlu0 %v135, 112
    %v148 = vpop.permute.xlu0 %147
    %149 = vrot.lane.b32.xlu0 %v135, 104
    %v150 = vpop.permute.xlu0 %149
    %152 = vrot.lane.b32.xlu0 %v136, 120
    %v153 = vpop.permute.xlu0 %152
    %154 = vrot.lane.b32.xlu0 %v136, 112
    %v155 = vpop.permute.xlu0 %154
    %156 = vrot.lane.b32.xlu0 %v136, 104
    %v157 = vpop.permute.xlu0 %156
    %159 = vrot.lane.b32.xlu0 %v129, 120
    %v160 = vpop.permute.xlu0 %159
    %161 = vrot.lane.b32.xlu0 %v129, 112
    %v162 = vpop.permute.xlu0 %161
    %163 = vrot.lane.b32.xlu0 %v129, 104
    %v164 = vpop.permute.xlu0 %163
    %166 = vrot.lane.b32.xlu0 %v132, 120
    %v167 = vpop.permute.xlu0 %166
    %168 = vrot.lane.b32.xlu0 %v132, 112
    %v169 = vpop.permute.xlu0 %168
    %170 = vrot.lane.b32.xlu0 %v132, 104
    %v171 = vpop.permute.xlu0 %170
    %173 = vrot.lane.b32.xlu0 %v142, 120
    %v174 = vpop.permute.xlu0 %173
    %175 = vrot.lane.b32.xlu0 %v142, 112
    %v176 = vpop.permute.xlu0 %175
    %177 = vrot.lane.b32.xlu0 %v142, 104
    %v178 = vpop.permute.xlu0 %177
    %180 = vrot.lane.b32.xlu0 %v143, 120
    %v181 = vpop.permute.xlu0 %180
    %182 = vrot.lane.b32.xlu0 %v143, 112
    %v183 = vpop.permute.xlu0 %182
    %184 = vrot.lane.b32.xlu0 %v143, 104
    %v185 = vpop.permute.xlu0 %184
    %v186 = vld [vmem:[#allocation5] sm:$0xff]
    %v187 = vld [vmem:[#allocation5 + $0x8] sm:$0xff]
    %v188 = vld [vmem:[#allocation5 + $0x10] sm:$0xff]
    %v189 = vld [vmem:[#allocation5 + $0x18] sm:$0xff]
    %v190 = vld [vmem:[#allocation5 + $0x20] sm:$0xff]
    %v191 = vld [vmem:[#allocation5 + $0x28] sm:$0xff]
    %v192 = vld [vmem:[#allocation5 + $0x30] sm:$0xff]
    %v193 = vld [vmem:[#allocation5 + $0x38] sm:$0xff]
    %194 = vrot.lane.b32.xlu0 %v129, 96
    %v195 = vpop.permute.xlu0 %194
    %vm196 = vcmask 64512
    %v197 = vsel %vm196, %v135, 0
    %v199 = vsel %vm196, %v195, 0
    %201 = vmatpush.xpose.msra.mxu0 0.0
    %202 = vmatpush.xpose.msra.mxu0 0.0
    %203 = vmatpush.xpose.msra.mxu0 0.0
    %204 = vmatpush.xpose.msra.mxu0 0.0
    %205 = vmatpush.xpose.msra.mxu0 0.0
    %206 = vmatpush.xpose.msra.mxu0 0.0
    %207 = vmatpush.xpose.msra.mxu0 0.0
    %208 = vmatpush.xpose.msra.mxu0 0.0
    %209 = vmatpush.xpose.msra.mxu0 0.0
    %210 = vmatpush.xpose.msra.mxu0 0.0
    %211 = vmatpush.xpose.msra.mxu0 0.0
    %212 = vmatpush.xpose.msra.mxu0 0.0
    %213 = vmatpush.xpose.msra.mxu0 0.0
    %214 = vmatpush.xpose.msra.mxu0 0.0
    %215 = vmatpush.xpose.msra.mxu0 0.0
    %216 = vmatpush.xpose.msra.mxu0 %v199
    %217 = vmatmul.f32.gmra.mxu0 %v197
    %v218 = vpop.f32.mrf.mxu0
    %v219 = vadd.f32 %v186, %v218
    %220 = vdwg.mxu0
    %221 = vrot.lane.b32.xlu0 %v160, 96
    %v222 = vpop.permute.xlu0 %221
    %v223 = vsel %vm196, %v146, 0
    %v225 = vsel %vm196, %v222, 0
    %227 = vmatpush.xpose.msra.mxu0 0.0
    %228 = vmatpush.xpose.msra.mxu0 0.0
    %229 = vmatpush.xpose.msra.mxu0 0.0
    %230 = vmatpush.xpose.msra.mxu0 0.0
    %231 = vmatpush.xpose.msra.mxu0 0.0
    %232 = vmatpush.xpose.msra.mxu0 0.0
    %233 = vmatpush.xpose.msra.mxu0 0.0
    %234 = vmatpush.xpose.msra.mxu0 0.0
    %235 = vmatpush.xpose.msra.mxu0 0.0
    %236 = vmatpush.xpose.msra.mxu0 0.0
    %237 = vmatpush.xpose.msra.mxu0 0.0
    %238 = vmatpush.xpose.msra.mxu0 0.0
    %239 = vmatpush.xpose.msra.mxu0 0.0
    %240 = vmatpush.xpose.msra.mxu0 0.0
    %241 = vmatpush.xpose.msra.mxu0 0.0
    %242 = vmatpush.xpose.msra.mxu0 %v225
    %243 = vmatmul.f32.gmra.mxu0 %v223
    %v244 = vpop.f32.mrf.mxu0
    %v245 = vadd.f32 %v187, %v244
    %246 = vdwg.mxu0
    %247 = vrot.lane.b32.xlu0 %v162, 96
    %v248 = vpop.permute.xlu0 %247
    %v249 = vsel %vm196, %v148, 0
    %v251 = vsel %vm196, %v248, 0
    %253 = vmatpush.xpose.msra.mxu0 0.0
    %254 = vmatpush.xpose.msra.mxu0 0.0
    %255 = vmatpush.xpose.msra.mxu0 0.0
    %256 = vmatpush.xpose.msra.mxu0 0.0
    %257 = vmatpush.xpose.msra.mxu0 0.0
    %258 = vmatpush.xpose.msra.mxu0 0.0
    %259 = vmatpush.xpose.msra.mxu0 0.0
    %260 = vmatpush.xpose.msra.mxu0 0.0
    %261 = vmatpush.xpose.msra.mxu0 0.0
    %262 = vmatpush.xpose.msra.mxu0 0.0
    %263 = vmatpush.xpose.msra.mxu0 0.0
    %264 = vmatpush.xpose.msra.mxu0 0.0
    %265 = vmatpush.xpose.msra.mxu0 0.0
    %266 = vmatpush.xpose.msra.mxu0 0.0
    %267 = vmatpush.xpose.msra.mxu0 0.0
    %268 = vmatpush.xpose.msra.mxu0 %v251
    %269 = vmatmul.f32.gmra.mxu0 %v249
    %v270 = vpop.f32.mrf.mxu0
    %v271 = vadd.f32 %v188, %v270
    %272 = vdwg.mxu0
    %273 = vrot.lane.b32.xlu0 %v164, 96
    %v274 = vpop.permute.xlu0 %273
    %v275 = vsel %vm196, %v150, 0
    %v277 = vsel %vm196, %v274, 0
    %279 = vmatpush.xpose.msra.mxu0 0.0
    %280 = vmatpush.xpose.msra.mxu0 0.0
    %281 = vmatpush.xpose.msra.mxu0 0.0
    %282 = vmatpush.xpose.msra.mxu0 0.0
    %283 = vmatpush.xpose.msra.mxu0 0.0
    %284 = vmatpush.xpose.msra.mxu0 0.0
    %285 = vmatpush.xpose.msra.mxu0 0.0
    %286 = vmatpush.xpose.msra.mxu0 0.0
    %287 = vmatpush.xpose.msra.mxu0 0.0
    %288 = vmatpush.xpose.msra.mxu0 0.0
    %289 = vmatpush.xpose.msra.mxu0 0.0
    %290 = vmatpush.xpose.msra.mxu0 0.0
    %291 = vmatpush.xpose.msra.mxu0 0.0
    %292 = vmatpush.xpose.msra.mxu0 0.0
    %293 = vmatpush.xpose.msra.mxu0 0.0
    %294 = vmatpush.xpose.msra.mxu0 %v277
    %295 = vmatmul.f32.gmra.mxu0 %v275
    %v296 = vpop.f32.mrf.mxu0
    %v297 = vadd.f32 %v189, %v296
    %298 = vdwg.mxu0
    %299 = vrot.lane.b32.xlu0 %v132, 96
    %v300 = vpop.permute.xlu0 %299
    %v301 = vsel %vm196, %v136, 0
    %v303 = vsel %vm196, %v300, 0
    %305 = vmatpush.xpose.msra.mxu0 0.0
    %306 = vmatpush.xpose.msra.mxu0 0.0
    %307 = vmatpush.xpose.msra.mxu0 0.0
    %308 = vmatpush.xpose.msra.mxu0 0.0
    %309 = vmatpush.xpose.msra.mxu0 0.0
    %310 = vmatpush.xpose.msra.mxu0 0.0
    %311 = vmatpush.xpose.msra.mxu0 0.0
    %312 = vmatpush.xpose.msra.mxu0 0.0
    %313 = vmatpush.xpose.msra.mxu0 0.0
    %314 = vmatpush.xpose.msra.mxu0 0.0
    %315 = vmatpush.xpose.msra.mxu0 0.0
    %316 = vmatpush.xpose.msra.mxu0 0.0
    %317 = vmatpush.xpose.msra.mxu0 0.0
    %318 = vmatpush.xpose.msra.mxu0 0.0
    %319 = vmatpush.xpose.msra.mxu0 0.0
    %320 = vmatpush.xpose.msra.mxu0 %v303
    %321 = vmatmul.f32.gmra.mxu0 %v301
    %v322 = vpop.f32.mrf.mxu0
    %v323 = vadd.f32 %v190, %v322
    %324 = vdwg.mxu0
    %325 = vrot.lane.b32.xlu0 %v167, 96
    %v326 = vpop.permute.xlu0 %325
    %v327 = vsel %vm196, %v153, 0
    %v329 = vsel %vm196, %v326, 0
    %331 = vmatpush.xpose.msra.mxu0 0.0
    %332 = vmatpush.xpose.msra.mxu0 0.0
    %333 = vmatpush.xpose.msra.mxu0 0.0
    %334 = vmatpush.xpose.msra.mxu0 0.0
    %335 = vmatpush.xpose.msra.mxu0 0.0
    %336 = vmatpush.xpose.msra.mxu0 0.0
    %337 = vmatpush.xpose.msra.mxu0 0.0
    %338 = vmatpush.xpose.msra.mxu0 0.0
    %339 = vmatpush.xpose.msra.mxu0 0.0
    %340 = vmatpush.xpose.msra.mxu0 0.0
    %341 = vmatpush.xpose.msra.mxu0 0.0
    %342 = vmatpush.xpose.msra.mxu0 0.0
    %343 = vmatpush.xpose.msra.mxu0 0.0
    %344 = vmatpush.xpose.msra.mxu0 0.0
    %345 = vmatpush.xpose.msra.mxu0 0.0
    %346 = vmatpush.xpose.msra.mxu0 %v329
    %347 = vmatmul.f32.gmra.mxu0 %v327
    %v348 = vpop.f32.mrf.mxu0
    %v349 = vadd.f32 %v191, %v348
    %350 = vdwg.mxu0
    %351 = vrot.lane.b32.xlu0 %v169, 96
    %v352 = vpop.permute.xlu0 %351
    %v353 = vsel %vm196, %v155, 0
    %v355 = vsel %vm196, %v352, 0
    %357 = vmatpush.xpose.msra.mxu0 0.0
    %358 = vmatpush.xpose.msra.mxu0 0.0
    %359 = vmatpush.xpose.msra.mxu0 0.0
    %360 = vmatpush.xpose.msra.mxu0 0.0
    %361 = vmatpush.xpose.msra.mxu0 0.0
    %362 = vmatpush.xpose.msra.mxu0 0.0
    %363 = vmatpush.xpose.msra.mxu0 0.0
    %364 = vmatpush.xpose.msra.mxu0 0.0
    %365 = vmatpush.xpose.msra.mxu0 0.0
    %366 = vmatpush.xpose.msra.mxu0 0.0
    %367 = vmatpush.xpose.msra.mxu0 0.0
    %368 = vmatpush.xpose.msra.mxu0 0.0
    %369 = vmatpush.xpose.msra.mxu0 0.0
    %370 = vmatpush.xpose.msra.mxu0 0.0
    %371 = vmatpush.xpose.msra.mxu0 0.0
    %372 = vmatpush.xpose.msra.mxu0 %v355
    %373 = vmatmul.f32.gmra.mxu0 %v353
    %v374 = vpop.f32.mrf.mxu0
    %v375 = vadd.f32 %v192, %v374
    %376 = vdwg.mxu0
    %377 = vrot.lane.b32.xlu0 %v171, 96
    %v378 = vpop.permute.xlu0 %377
    %v379 = vsel %vm196, %v157, 0
    %v381 = vsel %vm196, %v378, 0
    %383 = vmatpush.xpose.msra.mxu0 0.0
    %384 = vmatpush.xpose.msra.mxu0 0.0
    %385 = vmatpush.xpose.msra.mxu0 0.0
    %386 = vmatpush.xpose.msra.mxu0 0.0
    %387 = vmatpush.xpose.msra.mxu0 0.0
    %388 = vmatpush.xpose.msra.mxu0 0.0
    %389 = vmatpush.xpose.msra.mxu0 0.0
    %390 = vmatpush.xpose.msra.mxu0 0.0
    %391 = vmatpush.xpose.msra.mxu0 0.0
    %392 = vmatpush.xpose.msra.mxu0 0.0
    %393 = vmatpush.xpose.msra.mxu0 0.0
    %394 = vmatpush.xpose.msra.mxu0 0.0
    %395 = vmatpush.xpose.msra.mxu0 0.0
    %396 = vmatpush.xpose.msra.mxu0 0.0
    %397 = vmatpush.xpose.msra.mxu0 0.0
    %398 = vmatpush.xpose.msra.mxu0 %v381
    %399 = vmatmul.f32.gmra.mxu0 %v379
    %v400 = vpop.f32.mrf.mxu0
    %v401 = vadd.f32 %v193, %v400
    %402 = vdwg.mxu0
    %v403 = vsel %vm196, %v219, -inf
    %404 = vmax.xlane.f32.xlu0 %v403
    %v405 = vpop.xlane.xlu0 %404
    %v406 = vsel %vm196, %v245, -inf
    %407 = vmax.xlane.f32.xlu0 %v406
    %v408 = vpop.xlane.xlu0 %407
    %v409 = vsel %vm196, %v271, -inf
    %410 = vmax.xlane.f32.xlu0 %v409
    %v411 = vpop.xlane.xlu0 %410
    %v412 = vsel %vm196, %v297, -inf
    %413 = vmax.xlane.f32.xlu0 %v412
    %v414 = vpop.xlane.xlu0 %413
    %v415 = vsel %vm196, %v323, -inf
    %416 = vmax.xlane.f32.xlu0 %v415
    %v417 = vpop.xlane.xlu0 %416
    %v418 = vsel %vm196, %v349, -inf
    %419 = vmax.xlane.f32.xlu0 %v418
    %v420 = vpop.xlane.xlu0 %419
    %v421 = vsel %vm196, %v375, -inf
    %422 = vmax.xlane.f32.xlu0 %v421
    %v423 = vpop.xlane.xlu0 %422
    %v424 = vsel %vm196, %v401, -inf
    %425 = vmax.xlane.f32.xlu0 %v424
    %v426 = vpop.xlane.xlu0 %425
    %v427 = vsub.f32 %v219, %v405
    %v428 = vsub.f32 %v245, %v408
    %v429 = vsub.f32 %v271, %v411
    %v430 = vsub.f32 %v297, %v414
    %v431 = vsub.f32 %v323, %v417
    %v432 = vsub.f32 %v349, %v420
    %v433 = vsub.f32 %v375, %v423
    %v434 = vsub.f32 %v401, %v426
    %v435 = vmul.f32 %v427, 1.442695
    %v436 = vpow.pop %v435
    %v437 = vmul.f32 %v428, 1.442695
    %v438 = vpow.pop %v437
    %v439 = vmul.f32 %v429, 1.442695
    %v440 = vpow.pop %v439
    %v441 = vmul.f32 %v430, 1.442695
    %v442 = vpow.pop %v441
    %v443 = vmul.f32 %v431, 1.442695
    %v444 = vpow.pop %v443
    %v445 = vmul.f32 %v432, 1.442695
    %v446 = vpow.pop %v445
    %v447 = vmul.f32 %v433, 1.442695
    %v448 = vpow.pop %v447
    %v449 = vmul.f32 %v434, 1.442695
    %v450 = vpow.pop %v449
    %v451 = vsel %vm196, %v436, 0.0
    %452 = vadd.xlane.f32.xlu0 %v451
    %v453 = vpop.xlane.xlu0 %452
    %v454 = vsel %vm196, %v438, 0.0
    %455 = vadd.xlane.f32.xlu0 %v454
    %v456 = vpop.xlane.xlu0 %455
    %v457 = vsel %vm196, %v440, 0.0
    %458 = vadd.xlane.f32.xlu0 %v457
    %v459 = vpop.xlane.xlu0 %458
    %v460 = vsel %vm196, %v442, 0.0
    %461 = vadd.xlane.f32.xlu0 %v460
    %v462 = vpop.xlane.xlu0 %461
    %v463 = vsel %vm196, %v444, 0.0
    %464 = vadd.xlane.f32.xlu0 %v463
    %v465 = vpop.xlane.xlu0 %464
    %v466 = vsel %vm196, %v446, 0.0
    %467 = vadd.xlane.f32.xlu0 %v466
    %v468 = vpop.xlane.xlu0 %467
    %v469 = vsel %vm196, %v448, 0.0
    %470 = vadd.xlane.f32.xlu0 %v469
    %v471 = vpop.xlane.xlu0 %470
    %v472 = vsel %vm196, %v450, 0.0
    %473 = vadd.xlane.f32.xlu0 %v472
    %v474 = vpop.xlane.xlu0 %473
    %v475 = vrcp.pop %v453
    %v476 = vrcp.pop %v456
    %v477 = vrcp.pop %v459
    %v478 = vrcp.pop %v462
    %v479 = vrcp.pop %v465
    %v480 = vrcp.pop %v468
    %v481 = vrcp.pop %v471
    %v482 = vrcp.pop %v474
    %v483 = vmul.f32 %v436, %v475
    %v484 = vmul.f32 %v438, %v476
    %v485 = vmul.f32 %v440, %v477
    %v486 = vmul.f32 %v442, %v478
    %v487 = vmul.f32 %v444, %v479
    %v488 = vmul.f32 %v446, %v480
    %v489 = vmul.f32 %v448, %v481
    %v490 = vmul.f32 %v450, %v482
    %491 = vrot.lane.b32.xlu0 %v142, 64
    %v492 = vpop.permute.xlu0 %491
    %v495 = vsel %vm196, %v483, 0
    %497 = vmatpush.msra.mxu0 0.0
    %498 = vmatpush.msra.mxu0 0.0
    %499 = vmatpush.msra.mxu0 0.0
    %500 = vmatpush.msra.mxu0 0.0
    %501 = vmatpush.msra.mxu0 0.0
    %502 = vmatpush.msra.mxu0 0.0
    %503 = vmatpush.msra.mxu0 0.0
    %504 = vmatpush.msra.mxu0 0.0
    %505 = vmatpush.msra.mxu0 0.0
    %506 = vmatpush.msra.mxu0 0.0
    %507 = vmatpush.msra.mxu0 0.0
    %508 = vmatpush.msra.mxu0 0.0
    %509 = vmatpush.msra.mxu0 0.0
    %510 = vmatpush.msra.mxu0 0.0
    %511 = vmatpush.msra.mxu0 0.0
    %512 = vmatpush.msra.mxu0 %v492
    %513 = vmatmul.f32.gmra.mxu0 %v495
    %v514 = vpop.f32.mrf.mxu0
    %v515 = vadd.f32 0.0, %v514
    %516 = vdwg.mxu0
    %517 = vrot.lane.b32.xlu0 %v174, 64
    %v518 = vpop.permute.xlu0 %517
    %v521 = vsel %vm196, %v484, 0
    %523 = vmatpush.msra.mxu0 0.0
    %524 = vmatpush.msra.mxu0 0.0
    %525 = vmatpush.msra.mxu0 0.0
    %526 = vmatpush.msra.mxu0 0.0
    %527 = vmatpush.msra.mxu0 0.0
    %528 = vmatpush.msra.mxu0 0.0
    %529 = vmatpush.msra.mxu0 0.0
    %530 = vmatpush.msra.mxu0 0.0
    %531 = vmatpush.msra.mxu0 0.0
    %532 = vmatpush.msra.mxu0 0.0
    %533 = vmatpush.msra.mxu0 0.0
    %534 = vmatpush.msra.mxu0 0.0
    %535 = vmatpush.msra.mxu0 0.0
    %536 = vmatpush.msra.mxu0 0.0
    %537 = vmatpush.msra.mxu0 0.0
    %538 = vmatpush.msra.mxu0 %v518
    %539 = vmatmul.f32.gmra.mxu0 %v521
    %v540 = vpop.f32.mrf.mxu0
    %v541 = vadd.f32 0.0, %v540
    %542 = vdwg.mxu0
    %543 = vrot.lane.b32.xlu0 %v176, 64
    %v544 = vpop.permute.xlu0 %543
    %v547 = vsel %vm196, %v485, 0
    %549 = vmatpush.msra.mxu0 0.0
    %550 = vmatpush.msra.mxu0 0.0
    %551 = vmatpush.msra.mxu0 0.0
    %552 = vmatpush.msra.mxu0 0.0
    %553 = vmatpush.msra.mxu0 0.0
    %554 = vmatpush.msra.mxu0 0.0
    %555 = vmatpush.msra.mxu0 0.0
    %556 = vmatpush.msra.mxu0 0.0
    %557 = vmatpush.msra.mxu0 0.0
    %558 = vmatpush.msra.mxu0 0.0
    %559 = vmatpush.msra.mxu0 0.0
    %560 = vmatpush.msra.mxu0 0.0
    %561 = vmatpush.msra.mxu0 0.0
    %562 = vmatpush.msra.mxu0 0.0
    %563 = vmatpush.msra.mxu0 0.0
    %564 = vmatpush.msra.mxu0 %v544
    %565 = vmatmul.f32.gmra.mxu0 %v547
    %v566 = vpop.f32.mrf.mxu0
    %v567 = vadd.f32 0.0, %v566
    %568 = vdwg.mxu0
    %569 = vrot.lane.b32.xlu0 %v178, 64
    %v570 = vpop.permute.xlu0 %569
    %v573 = vsel %vm196, %v486, 0
    %575 = vmatpush.msra.mxu0 0.0
    %576 = vmatpush.msra.mxu0 0.0
    %577 = vmatpush.msra.mxu0 0.0
    %578 = vmatpush.msra.mxu0 0.0
    %579 = vmatpush.msra.mxu0 0.0
    %580 = vmatpush.msra.mxu0 0.0
    %581 = vmatpush.msra.mxu0 0.0
    %582 = vmatpush.msra.mxu0 0.0
    %583 = vmatpush.msra.mxu0 0.0
    %584 = vmatpush.msra.mxu0 0.0
    %585 = vmatpush.msra.mxu0 0.0
    %586 = vmatpush.msra.mxu0 0.0
    %587 = vmatpush.msra.mxu0 0.0
    %588 = vmatpush.msra.mxu0 0.0
    %589 = vmatpush.msra.mxu0 0.0
    %590 = vmatpush.msra.mxu0 %v570
    %591 = vmatmul.f32.gmra.mxu0 %v573
    %v592 = vpop.f32.mrf.mxu0
    %v593 = vadd.f32 0.0, %v592
    %594 = vdwg.mxu0
    %595 = vrot.lane.b32.xlu0 %v143, 64
    %v596 = vpop.permute.xlu0 %595
    %v599 = vsel %vm196, %v487, 0
    %601 = vmatpush.msra.mxu0 0.0
    %602 = vmatpush.msra.mxu0 0.0
    %603 = vmatpush.msra.mxu0 0.0
    %604 = vmatpush.msra.mxu0 0.0
    %605 = vmatpush.msra.mxu0 0.0
    %606 = vmatpush.msra.mxu0 0.0
    %607 = vmatpush.msra.mxu0 0.0
    %608 = vmatpush.msra.mxu0 0.0
    %609 = vmatpush.msra.mxu0 0.0
    %610 = vmatpush.msra.mxu0 0.0
    %611 = vmatpush.msra.mxu0 0.0
    %612 = vmatpush.msra.mxu0 0.0
    %613 = vmatpush.msra.mxu0 0.0
    %614 = vmatpush.msra.mxu0 0.0
    %615 = vmatpush.msra.mxu0 0.0
    %616 = vmatpush.msra.mxu0 %v596
    %617 = vmatmul.f32.gmra.mxu0 %v599
    %v618 = vpop.f32.mrf.mxu0
    %v619 = vadd.f32 0.0, %v618
    %620 = vdwg.mxu0
    %621 = vrot.lane.b32.xlu0 %v181, 64
    %v622 = vpop.permute.xlu0 %621
    %v625 = vsel %vm196, %v488, 0
    %627 = vmatpush.msra.mxu0 0.0
    %628 = vmatpush.msra.mxu0 0.0
    %629 = vmatpush.msra.mxu0 0.0
    %630 = vmatpush.msra.mxu0 0.0
    %631 = vmatpush.msra.mxu0 0.0
    %632 = vmatpush.msra.mxu0 0.0
    %633 = vmatpush.msra.mxu0 0.0
    %634 = vmatpush.msra.mxu0 0.0
    %635 = vmatpush.msra.mxu0 0.0
    %636 = vmatpush.msra.mxu0 0.0
    %637 = vmatpush.msra.mxu0 0.0
    %638 = vmatpush.msra.mxu0 0.0
    %639 = vmatpush.msra.mxu0 0.0
    %640 = vmatpush.msra.mxu0 0.0
    %641 = vmatpush.msra.mxu0 0.0
    %642 = vmatpush.msra.mxu0 %v622
    %643 = vmatmul.f32.gmra.mxu0 %v625
    %v644 = vpop.f32.mrf.mxu0
    %v645 = vadd.f32 0.0, %v644
    %646 = vdwg.mxu0
    %647 = vrot.lane.b32.xlu0 %v183, 64
    %v648 = vpop.permute.xlu0 %647
    %v651 = vsel %vm196, %v489, 0
    %653 = vmatpush.msra.mxu0 0.0
    %654 = vmatpush.msra.mxu0 0.0
    %655 = vmatpush.msra.mxu0 0.0
    %656 = vmatpush.msra.mxu0 0.0
    %657 = vmatpush.msra.mxu0 0.0
    %658 = vmatpush.msra.mxu0 0.0
    %659 = vmatpush.msra.mxu0 0.0
    %660 = vmatpush.msra.mxu0 0.0
    %661 = vmatpush.msra.mxu0 0.0
    %662 = vmatpush.msra.mxu0 0.0
    %663 = vmatpush.msra.mxu0 0.0
    %664 = vmatpush.msra.mxu0 0.0
    %665 = vmatpush.msra.mxu0 0.0
    %666 = vmatpush.msra.mxu0 0.0
    %667 = vmatpush.msra.mxu0 0.0
    %668 = vmatpush.msra.mxu0 %v648
    %669 = vmatmul.f32.gmra.mxu0 %v651
    %v670 = vpop.f32.mrf.mxu0
    %v671 = vadd.f32 0.0, %v670
    %672 = vdwg.mxu0
    %673 = vrot.lane.b32.xlu0 %v185, 64
    %v674 = vpop.permute.xlu0 %673
    %v677 = vsel %vm196, %v490, 0
    %679 = vmatpush.msra.mxu0 0.0
    %680 = vmatpush.msra.mxu0 0.0
    %681 = vmatpush.msra.mxu0 0.0
    %682 = vmatpush.msra.mxu0 0.0
    %683 = vmatpush.msra.mxu0 0.0
    %684 = vmatpush.msra.mxu0 0.0
    %685 = vmatpush.msra.mxu0 0.0
    %686 = vmatpush.msra.mxu0 0.0
    %687 = vmatpush.msra.mxu0 0.0
    %688 = vmatpush.msra.mxu0 0.0
    %689 = vmatpush.msra.mxu0 0.0
    %690 = vmatpush.msra.mxu0 0.0
    %691 = vmatpush.msra.mxu0 0.0
    %692 = vmatpush.msra.mxu0 0.0
    %693 = vmatpush.msra.mxu0 0.0
    %694 = vmatpush.msra.mxu0 %v674
    %695 = vmatmul.f32.gmra.mxu0 %v677
    %v696 = vpop.f32.mrf.mxu0
    %v697 = vadd.f32 0.0, %v696
    %698 = vdwg.mxu0
    %700 = vrot.lane.b32.xlu0 %v541, 8
    %v701 = vpop.permute.xlu0 %700
    %704 = vrot.lane.b32.xlu0 %v567, 16
    %v705 = vpop.permute.xlu0 %704
    %708 = vrot.lane.b32.xlu0 %v593, 24
    %v709 = vpop.permute.xlu0 %708
    %v711 = vsel %vm196, %v515, %v701
    %vm712 = vcmask 130048
    %v713 = vsel %vm712, %v711, %v705
    %vm714 = vcmask 195584
    %v715 = vsel %vm714, %v713, %v709
    %717 = vrot.lane.b32.xlu0 %v645, 8
    %v718 = vpop.permute.xlu0 %717
    %721 = vrot.lane.b32.xlu0 %v671, 16
    %v722 = vpop.permute.xlu0 %721
    %725 = vrot.lane.b32.xlu0 %v697, 24
    %v726 = vpop.permute.xlu0 %725
    %v728 = vsel %vm196, %v619, %v718
    %v729 = vsel %vm712, %v728, %v722
    %v730 = vsel %vm714, %v729, %v726
    %v731 = vld [vmem:[#allocation8] sm:$0xff]
    %v732 = vld [vmem:[#allocation8 + $0x8] sm:$0xff]
    %v733 = vld [vmem:[#allocation8 + $0x10] sm:$0xff]
    %v734 = vld [vmem:[#allocation8 + $0x18] sm:$0xff]
    %v735 = vperm.slane %v99, 2
    %v737 = vsel %vm104, %v715, 0
    %v740 = vsel %vm104, %v730, 0
    %742 = vmatpush.msra.mxu0 0.0
    %743 = vmatpush.msra.mxu0 0.0
    %744 = vmatpush.msra.mxu0 0.0
    %745 = vmatpush.msra.mxu0 0.0
    %746 = vmatpush.msra.mxu0 0.0
    %747 = vmatpush.msra.mxu0 0.0
    %748 = vmatpush.msra.mxu0 0.0
    %749 = vmatpush.msra.mxu0 0.0
    %750 = vmatpush.msra.mxu0 0.0
    %751 = vmatpush.msra.mxu0 0.0
    %752 = vmatpush.msra.mxu0 0.0
    %753 = vmatpush.msra.mxu0 0.0
    %754 = vmatpush.msra.mxu0 %v734
    %755 = vmatpush.msra.mxu0 %v733
    %756 = vmatpush.msra.mxu0 %v732
    %757 = vmatpush.msra.mxu0 %v731
    %758 = vmatmul.f32.gmra.mxu0 %v737
    %v759 = vpop.f32.mrf.mxu0
    %v760 = vadd.f32 %v735, %v759
    %761 = vmatmul.f32.gmra.mxu0 %v740
    %v762 = vpop.f32.mrf.mxu0
    %v763 = vadd.f32 %v735, %v762
    %764 = vdwg.mxu0
    %v765 = vadd.f32 %v760, %v97
    %v766 = vadd.f32 %v763, %v98
    %v767 = vsel %vm104, %v765, 0.0
    %768 = vadd.xlane.f32.xlu0 %v767
    %v769 = vpop.xlane.xlu0 %768
    %v770 = vsel %vm104, %v766, 0.0
    %771 = vadd.xlane.f32.xlu0 %v770
    %v772 = vpop.xlane.xlu0 %771
    %v773 = vrcp.pop 32.0
    %v774 = vmul.f32 32.0, %v773
    %v775 = vsub.f32 1.0, %v774
    %v776 = vmul.f32 %v773, %v775
    %v777 = vadd.f32 %v773, %v776
    %vm778 = vweird.f32 %v773
    %v779 = vsel %vm778, %v773, %v777
    %v780 = vmul.f32 %v769, %v779
    %v781 = vmul.f32 %v772, %v779
    %v782 = vsub.f32 %v765, %v780
    %v783 = vsub.f32 %v766, %v781
    %v784 = vmul.f32 %v782, %v782
    %v785 = vmul.f32 %v783, %v783
    %v786 = vsel %vm104, %v784, 0.0
    %787 = vadd.xlane.f32.xlu0 %v786
    %v788 = vpop.xlane.xlu0 %787
    %v789 = vsel %vm104, %v785, 0.0
    %790 = vadd.xlane.f32.xlu0 %v789
    %v791 = vpop.xlane.xlu0 %790
    %v792 = vmul.f32 %v788, %v779
    %v793 = vmul.f32 %v791, %v779
    %v794 = vadd.f32 %v792, 1e-12
    %v795 = vadd.f32 %v793, 1e-12
    %v796 = vrsqrt.pop %v794
    %v797 = vmul.f32 %v796, %v794
    %v798 = vmul.f32 %v797, %v796
    %v799 = vmul.f32 0.5, %v798
    %v800 = vsub.f32 1.5, %v799
    %v801 = vmul.f32 %v796, %v800
    %vm802 = vweird.f32 %v794
    %vm803 = vweird.f32 %v796
    %vm804 = vmor %vm802, %vm803
    %v805 = vsel %vm804, %v796, %v801
    %v806 = vrsqrt.pop %v795
    %v807 = vmul.f32 %v806, %v795
    %v808 = vmul.f32 %v807, %v806
    %v809 = vmul.f32 0.5, %v808
    %v810 = vsub.f32 1.5, %v809
    %v811 = vmul.f32 %v806, %v810
    %vm812 = vweird.f32 %v795
    %vm813 = vweird.f32 %v806
    %vm814 = vmor %vm812, %vm813
    %v815 = vsel %vm814, %v806, %v811
    %v816 = vmul.f32 %v782, %v805
    %v817 = vmul.f32 %v783, %v815
    %v818 = vperm.slane %v99, 3
    %v819 = vmul.f32 %v816, %v818
    %v820 = vmul.f32 %v817, %v818
    %v821 = vperm.slane %v99, 4
    %v822 = vadd.f32 %v819, %v821
    %v823 = vadd.f32 %v820, %v821
    %824 = vst.msk [vmem:[#allocation11] sm:$0xff] %vm104, %v822
    %825 = vst.msk [vmem:[#allocation11 + $0x8] sm:$0xff] %vm104, %v823
    // Predicated region
    $region42: #{tpu_custom_call.1} parent=1 // pred_check
      _
    $region43: #{tpu_custom_call.1} parent=1 // pred_check_branch
      %827 = sbr.rel (0) target = $region45
    $region44: #{tpu_custom_call.1} parent=1 // pred_region
      %829 = vsyncadd [#allocation4], 0
      %s830 = sshll.u32 [#allocation11], 4
      %s831 = int_to_ptr.vmem [resolvable:$true] %s830
      %s832 = sshll.u32 %s5, 4
      %s833 = int_to_ptr.hbm [resolvable:$true] %s832
      %838 = dma.vmem_to_hbm [thread:$0]  %s831, 256, %s833, [#allocation4], 128, 128, 8
    $region45: #{tpu_custom_call.1} parent=1 // pred_fallthru
      _
    // Predicated region
    $region46: #{tpu_custom_call.1} parent=1 // pred_check
      _
    $region47: #{tpu_custom_call.1} parent=1 // pred_check_branch
      %840 = sbr.rel (0) target = $region49
    $region48: #{tpu_custom_call.1} parent=1 // pred_region
      %842 = dma.done [#allocation4], 256
    $region49: #{tpu_custom_call.1} parent=1 // pred_fallthru
      _
    %843 = vsyncpa [#allocation3], 1
    %844 = vsyncpa [#allocation6], 1
    %845 = vsyncpa [#allocation9], 1
    %846 = vsyncpa [#allocation4], 1

</llo_original>
